<compile_context>
chip_gen: v5e
topology: v5e:2x2
jax: 0.10.0
libtpu: 0.0.40
codegen_flags: <defaults>
</compile_context>

<pallas_src>
import functools

import jax
import jax.numpy as jnp
from jax.experimental import pallas as pl
from jax.experimental.pallas import tpu as pltpu


def _round_up(x, m):
    return (x + m - 1) // m * m


def _transconv_matmul_kernel(w_ref, b_ref, x_ref, o_ref):
    """One fused (Cout, CK) x (CK, LT) MXU matmul per grid step.

    w_ref: (1, Cout, CK)    bf16  per-residue packed weights (taps fused into CK)
    b_ref: (Cout, 1)        f32   bias, broadcast over the lane dim
    x_ref: (1, 1, CK, LT)   bf16  im2col columns, spatial in lanes
    o_ref: (1, 1, Cout, LT) f32   lane-dense output tile
    """
    acc = jnp.dot(w_ref[0], x_ref[0, 0], preferred_element_type=jnp.float32)
    o_ref[0, 0] = acc + b_ref[...]


def trans_conv_block(x_nchw, w_t, b, *, stride=1, padding=0, output_padding=0):
    """ConvTranspose2d forward matching PyTorch semantics.

    x_nchw: (N, Cin, H, W)
    w_t:    (Cin, Cout, K, K)   -- PyTorch ConvTranspose2d weight layout
    b:      (Cout,)
    returns (N, Cout, H_out, W_out), f32
    """
    N, Cin, H, W = x_nchw.shape
    Cin_w, Cout, K, K2 = w_t.shape
    assert Cin_w == Cin and K2 == K
    s, p, op = stride, padding, output_padding
    H_out = (H - 1) * s - 2 * p + K + op
    W_out = (W - 1) * s - 2 * p + K + op

    Tk = -(-K // s)            # tap slots per residue per spatial dim (zero-padded)
    Hq = -(-H_out // s)        # sub-image extent per residue
    Wq = -(-W_out // s)
    CK = Tk * Tk * Cin         # fused contraction dim (all taps x channels)
    HWq = Hq * Wq

    # lane tiling: multiple of 128 for unmasked stores
    LT = min(_round_up(HWq, 128), 512)
    HWq_pad = _round_up(HWq, LT)
    n_lane_tiles = HWq_pad // LT

    # Static per-residue index bookkeeping.  Output pixel oy = qy*s + ry receives
    # contributions from kernel rows kh = kh0(ry) + u*s (u < Tk, kh < K) taken at
    # input row iy = qy + dy0(ry) - u.  Same formula for the width dimension.
    kh0 = [(r + p) % s for r in range(s)]
    dy0 = [(r + p) // s for r in range(s)]
    offs = [dy0[r] - u for r in range(s) for u in range(Tk)]
    off_min, off_max = min(offs), max(offs)
    pad_lo_y = max(0, -off_min)
    pad_hi_y = max(0, (Hq - 1) + off_max - (H - 1))
    pad_lo_x = max(0, -off_min)
    pad_hi_x = max(0, (Wq - 1) + off_max - (W - 1))

    xpad = jnp.pad(x_nchw, ((0, 0), (0, 0),
                            (pad_lo_y, pad_hi_y), (pad_lo_x, pad_hi_x)))
    xpad = xpad.astype(jnp.bfloat16)

    # im2col on the ORIGINAL (non-dilated) input: one (CK, HWq) slab per residue.
    cols_res = []
    wms = []
    for ry in range(s):
        for rx in range(s):
            taps = []
            wrows = []
            for u in range(Tk):
                for v in range(Tk):
                    kh = kh0[ry] + u * s
                    kw = kh0[rx] + v * s
                    if kh < K and kw < K:
                        sy = dy0[ry] - u + pad_lo_y
                        sx = dy0[rx] - v + pad_lo_x
                        patch = xpad[:, :, sy:sy + Hq, sx:sx + Wq]
                        wrow = jnp.transpose(w_t[:, :, kh, kw], (1, 0))  # (Cout, Cin)
                    else:   # padded tap slot: zero weight, zero data
                        patch = jnp.zeros((N, Cin, Hq, Wq), jnp.bfloat16)
                        wrow = jnp.zeros((Cout, Cin), w_t.dtype)
                    taps.append(patch.reshape(N, Cin, HWq))
                    wrows.append(wrow)
            cols_res.append(jnp.concatenate(taps, axis=1))   # (N, CK, HWq)
            wms.append(jnp.concatenate(wrows, axis=1))       # (Cout, CK)
    cols = jnp.stack(cols_res, axis=1)                       # (N, s*s, CK, HWq)
    Wm = jnp.stack(wms, axis=0).astype(jnp.bfloat16)         # (s*s, Cout, CK)

    if HWq_pad != HWq:
        cols = jnp.pad(cols, ((0, 0), (0, 0), (0, 0), (0, HWq_pad - HWq)))
    b2 = b.reshape(Cout, 1).astype(jnp.float32)

    grid = (N, s * s, n_lane_tiles)
    sub = pl.pallas_call(
        _transconv_matmul_kernel,
        out_shape=jax.ShapeDtypeStruct((N, s * s, Cout, HWq_pad), jnp.float32),
        grid=grid,
        in_specs=[
            pl.BlockSpec((1, Cout, CK), lambda n, r, t: (r, 0, 0)),
            pl.BlockSpec((Cout, 1), lambda n, r, t: (0, 0)),
            pl.BlockSpec((1, 1, CK, LT), lambda n, r, t: (n, r, 0, t)),
        ],
        out_specs=pl.BlockSpec((1, 1, Cout, LT), lambda n, r, t: (n, r, 0, t)),
        compiler_params=pltpu.CompilerParams(
            dimension_semantics=("parallel", "parallel", "parallel")),
    )(Wm, b2, cols)

    # depth-to-space: interleave the s*s residue sub-images into NCHW output
    sub = sub[..., :HWq].reshape(N, s, s, Cout, Hq, Wq)
    out = jnp.transpose(sub, (0, 3, 4, 1, 5, 2)).reshape(N, Cout, Hq * s, Wq * s)
    return out[:, :, :H_out, :W_out]


if __name__ == "__main__":
    # TransConvBlock(in_channels=4, out_channels=8, ksize=3, stride=2,
    #                padding=1, output_padding=1, norm_layer=None, act_layer=None)
    N, Cin, H, W = 2, 4, 16, 16
    Cout, K, stride, padding, output_padding = 8, 3, 2, 1, 1

    key = jax.random.PRNGKey(0)
    kx, kw, kb = jax.random.split(key, 3)
    x = jax.random.normal(kx, (N, Cin, H, W), dtype=jnp.float32)
    # PyTorch shapes: weight (Cin, Cout, K, K), bias (Cout,)
    w_t = 0.1 * jax.random.normal(kw, (Cin, Cout, K, K), dtype=jnp.float32)
    b = 0.1 * jax.random.normal(kb, (Cout,), dtype=jnp.float32)

    fwd = jax.jit(functools.partial(trans_conv_block, stride=stride,
                                    padding=padding,
                                    output_padding=output_padding))
    out = jax.block_until_ready(fwd(x, w_t, b))

    H_out = (H - 1) * stride - 2 * padding + K + output_padding
    W_out = (W - 1) * stride - 2 * padding + K + output_padding
    assert out.shape == (N, Cout, H_out, W_out), out.shape

    # Reference: XLA dilated conv (same math as PyTorch ConvTranspose2d), with
    # inputs pre-quantized to bf16 so it uses exactly the products the kernel's
    # bf16 MXU matmul uses (difference is accumulation order only).
    xq = x.astype(jnp.bfloat16).astype(jnp.float32)
    wq = w_t.astype(jnp.bfloat16).astype(jnp.float32)
    pad_lo = K - 1 - padding
    pad_hi = K - 1 - padding + output_padding
    w_ref = jnp.transpose(wq[:, :, ::-1, ::-1], (1, 0, 2, 3))   # (Cout, Cin, K, K)
    ref = jax.lax.conv_general_dilated(
        xq, w_ref, window_strides=(1, 1),
        padding=[(pad_lo, pad_hi), (pad_lo, pad_hi)],
        lhs_dilation=(stride, stride),
        dimension_numbers=("NCHW", "OIHW", "NCHW"),
    ) + b[None, :, None, None]
    ref = jax.block_until_ready(ref)

    err = float(jnp.max(jnp.abs(out - ref)))
    assert jnp.allclose(out, ref, atol=5e-3, rtol=5e-3), f"mismatch vs reference: {err}"
    print("KERNEL_OK")
</pallas_src>

<mosaic_0001>
module attributes {stable_mosaic.version = 11 : i64} {
  func.func @_transconv_matmul_kernel(%arg0: i32, %arg1: i32, %arg2: i32, %arg3: memref<1x8x16xbf16, #tpu.memory_space<vmem>>, %arg4: memref<8x1xf32, #tpu.memory_space<vmem>>, %arg5: memref<1x1x16x256xbf16, #tpu.memory_space<vmem>>, %arg6: memref<1x1x8x256xf32, #tpu.memory_space<vmem>>) attributes {dimension_semantics = [#tpu.dimension_semantics<parallel>, #tpu.dimension_semantics<parallel>, #tpu.dimension_semantics<parallel>], iteration_bounds = array<i64: 2, 4, 1>, scalar_prefetch = 0 : i64, scratch_operands = 0 : i64, tpu.core_type = #tpu.core_type<tc>, window_params = [{transform_indices = @transform_0, window_bounds = array<i64: 1, 8, 16>}, {pipeline_mode = #tpu.pipeline_mode<synchronous>, transform_indices = @transform_1, window_bounds = array<i64: 8, 1>}, {transform_indices = @transform_2, window_bounds = array<i64: 1, 1, 16, 256>}, {transform_indices = @transform_3, window_bounds = array<i64: 1, 1, 8, 256>}]} {
    %c0 = arith.constant 0 : index
    %c0_0 = arith.constant 0 : index
    %c0_1 = arith.constant 0 : index
    %0 = vector.load %arg3[%c0, %c0_0, %c0_1] : memref<1x8x16xbf16, #tpu.memory_space<vmem>>, vector<1x8x16xbf16>
    %1 = vector.shape_cast %0 : vector<1x8x16xbf16> to vector<8x16xbf16>
    %c0_2 = arith.constant 0 : index
    %c0_3 = arith.constant 0 : index
    %c0_4 = arith.constant 0 : index
    %c0_5 = arith.constant 0 : index
    %2 = vector.load %arg5[%c0_2, %c0_3, %c0_4, %c0_5] : memref<1x1x16x256xbf16, #tpu.memory_space<vmem>>, vector<1x1x16x256xbf16>
    %3 = vector.shape_cast %2 : vector<1x1x16x256xbf16> to vector<16x256xbf16>
    %cst = arith.constant dense<0.000000e+00> : vector<8x256xf32>
    %4 = tpu.matmul %1, %3, %cst {dimension_numbers = #tpu.dot_dimension_numbers<[1], [0], [0], [1], [0, 0, 1, 1], [], []>} : vector<8x16xbf16>, vector<16x256xbf16>, vector<8x256xf32> -> vector<8x256xf32>
    %c0_6 = arith.constant 0 : index
    %c0_7 = arith.constant 0 : index
    %5 = vector.load %arg4[%c0_6, %c0_7] : memref<8x1xf32, #tpu.memory_space<vmem>>, vector<8x1xf32>
    %6 = vector.broadcast %5 : vector<8x1xf32> to vector<8x256xf32>
    %7 = arith.addf %4, %6 : vector<8x256xf32>
    %c0_8 = arith.constant 0 : index
    %c0_9 = arith.constant 0 : index
    %c0_10 = arith.constant 0 : index
    %c0_11 = arith.constant 0 : index
    %8 = vector.load %arg6[%c0_8, %c0_9, %c0_10, %c0_11] : memref<1x1x8x256xf32, #tpu.memory_space<vmem>>, vector<1x1x8x256xf32>
    %9 = vector.shape_cast %8 : vector<1x1x8x256xf32> to vector<8x256xf32>
    %10 = vector.shape_cast %7 : vector<8x256xf32> to vector<1x1x8x256xf32>
    tpu.vector_store %arg6[%c0_8, %c0_9, %c0_10, %c0_11], %10 {strides = array<i32>} : memref<1x1x8x256xf32, #tpu.memory_space<vmem>>, vector<1x1x8x256xf32>,
    return
  }
  func.func @transform_0(%arg0: i32, %arg1: i32, %arg2: i32) -> (i32, i32, i32) {
    %c0_i32 = arith.constant 0 : i32
    %c0_i32_0 = arith.constant 0 : i32
    %c0_i32_1 = arith.constant 0 : i32
    return %arg1, %c0_i32, %c0_i32_0 : i32, i32, i32
  }
  func.func @transform_1(%arg0: i32, %arg1: i32, %arg2: i32) -> (i32, i32) {
    %c0_i32 = arith.constant 0 : i32
    %c0_i32_0 = arith.constant 0 : i32
    %c0_i32_1 = arith.constant 0 : i32
    return %c0_i32, %c0_i32_0 : i32, i32
  }
  func.func @transform_2(%arg0: i32, %arg1: i32, %arg2: i32) -> (i32, i32, i32, i32) {
    %c0_i32 = arith.constant 0 : i32
    %c0_i32_0 = arith.constant 0 : i32
    return %arg0, %arg1, %c0_i32, %arg2 : i32, i32, i32, i32
  }
  func.func @transform_3(%arg0: i32, %arg1: i32, %arg2: i32) -> (i32, i32, i32, i32) {
    %c0_i32 = arith.constant 0 : i32
    %c0_i32_0 = arith.constant 0 : i32
    return %arg0, %arg1, %c0_i32, %arg2 : i32, i32, i32, i32
  }
}

</mosaic_0001>

<llo_original>
// kernel: trans_conv_block.1
$region0: #{trans_conv_block.1}
  #allocation0 [shape = 'u32[]', space=smem, size = 0x4, offset = 0x4, fixed_abs, tag = 'smem constant byte address 0x4 - core index']
  #allocation1 [shape = 'u32[72,128]{1,0:T(1,128)}', space=vmem, size = 0x9000, scoped, tag = 'internal scratch']
  %s0 = inlined_call_operand.vmem [shape: bf16[4,8,16], index: 0, kind: input, shape index: {}]
  %s1 = inlined_call_operand.vmem [shape: f32[8,1], index: 1, kind: input, shape index: {}]
  %s2 = inlined_call_operand.vmem [shape: bf16[2,4,16,256], index: 2, kind: input, shape index: {}]
  %s3 = inlined_call_operand.vmem [shape: f32[2,4,8,256], index: 3, kind: output, shape index: {}]
  %s4 = sld [smem:[#allocation0]]
  $region45: #{trans_conv_block.1} parent=0
    _
  %s6 = ssub.s32 1, %s4
  %s7 = scalar_select 0, %s6, %s4
  loop: start=0, step=1, limit=10
  $region2: #{trans_conv_block.1} parent=0 // loop_pre_header
    _
  $region3: #{trans_conv_block.1} parent=0 // loop_header
    %s9 = sphi 0, %s13
    %p10 = scmp.ge.s32.totalorder %s9, 10
    %s16 = sphi 0, %s35
    %s17 = sphi 0, %s31
    %s18 = sphi 0, %s27
    %s19 = sphi 0, %s16
    %s20 = sphi 0, %s17
    %s21 = sphi 0, %s18
    %s22 = sphi 0, %s19
    %s23 = sphi 0, %s20
    %s24 = sphi 0, %s21
    %s38 = sphi 0, %s40
    %s41 = sphi 0, %s38
    %s42 = sphi 0, %s41
    %s58 = sphi 0, %s42
    %s62 = sphi 0, %s62
    %s64 = sphi 0, %s62
    %s65 = sphi 0, %s64
    %s79 = sphi 0, %s65
    %s89 = sphi 0, %s91
    %s92 = sphi 0, %s89
    %s93 = sphi 0, %s92
    %s109 = sphi 0, %s93
    %s119 = sphi 0, %s121
    %s122 = sphi 0, %s119
    %s123 = sphi 0, %s122
    %s139 = sphi 0, %s123
  $region4: #{trans_conv_block.1} parent=0 // loop_header_branch
    %12 = sbr.rel (%p10) target = $region8
  $region5: #{trans_conv_block.1} parent=0 // loop_body
    %s14 = ssub.s32 %s9, 1
    %s15 = ssub.s32 %s9, 2
    %s25 = sadd.s32 1, %s18
    %p26 = scmp.ge.s32.totalorder %s25, 1
    %s27 = scalar_select %p26, 0, %s25
    %s28 = sadd.s32 1, %s17
    %s29 = scalar_select %p26, %s28, %s17
    %p30 = scmp.ge.s32.totalorder %s29, 4
    %s31 = scalar_select %p30, 0, %s29
    %s32 = sadd.s32 1, %s16
    %s33 = scalar_select %p30, %s32, %s16
    %p34 = scmp.ge.s32.totalorder %s33, 2
    %s35 = scalar_select %p34, 0, %s33
    %s36 = ssub.s32 %s17, %s31
    %p37 = scmp.eq.s32.totalorder %s36, 0
    %s39 = sadd.s32 %s38, 1
    %s40 = scalar_select %p37, %s38, %s39
    %p43 = pneg %p37
    %p44 = scmp.eq.s32.totalorder %s9, 7
    %p45 = por %p43, %p44
    %p46 = scmp.ne.s32.totalorder %s38, %s41
    %p47 = scmp.eq.s32.totalorder %s9, 0
    %p48 = por %p46, %p47
    %p49 = scmp.ne.s32.totalorder %s38, %s41
    %p50 = scmp.eq.s32.totalorder %s14, 7
    %p51 = por %p49, %p50
    %p52 = scmp.ne.s32.totalorder %s41, %s42
    %p53 = scmp.eq.s32.totalorder %s14, 0
    %p54 = por %p52, %p53
    %p55 = scmp.ne.s32.totalorder %s41, %s42
    %p56 = scmp.eq.s32.totalorder %s15, 7
    %p57 = por %p55, %p56
    %p59 = scmp.ne.s32.totalorder %s42, %s58
    %p60 = scmp.eq.s32.totalorder %s15, 0
    %p61 = por %p59, %p60
    %s63 = sadd.s32 %s62, 1
    %p66 = scmp.eq.s32.totalorder %s9, 7
    %p67 = scmp.ne.s32.totalorder %s62, %s64
    %p68 = scmp.eq.s32.totalorder %s9, 0
    %p69 = por %p67, %p68
    %p70 = scmp.ne.s32.totalorder %s62, %s64
    %p71 = scmp.eq.s32.totalorder %s14, 7
    %p72 = por %p70, %p71
    %p73 = scmp.ne.s32.totalorder %s64, %s65
    %p74 = scmp.eq.s32.totalorder %s14, 0
    %p75 = por %p73, %p74
    %p76 = scmp.ne.s32.totalorder %s64, %s65
    %p77 = scmp.eq.s32.totalorder %s15, 7
    %p78 = por %p76, %p77
    %p80 = scmp.ne.s32.totalorder %s65, %s79
    %p81 = scmp.eq.s32.totalorder %s15, 0
    %p82 = por %p80, %p81
    %s83 = ssub.s32 %s16, %s35
    %s84 = ssub.s32 %s17, %s31
    %s85 = sor.u32 %s83, %s84
    %s86 = ssub.s32 %s18, %s27
    %s87 = sor.u32 %s85, %s86
    %p88 = scmp.eq.s32.totalorder %s87, 0
    %s90 = sadd.s32 %s89, 1
    %s91 = scalar_select %p88, %s89, %s90
    %p94 = pneg %p88
    %p95 = scmp.eq.s32.totalorder %s9, 7
    %p96 = por %p94, %p95
    %p97 = scmp.ne.s32.totalorder %s89, %s92
    %p98 = scmp.eq.s32.totalorder %s9, 0
    %p99 = por %p97, %p98
    %p100 = scmp.ne.s32.totalorder %s89, %s92
    %p101 = scmp.eq.s32.totalorder %s14, 7
    %p102 = por %p100, %p101
    %p103 = scmp.ne.s32.totalorder %s92, %s93
    %p104 = scmp.eq.s32.totalorder %s14, 0
    %p105 = por %p103, %p104
    %p106 = scmp.ne.s32.totalorder %s92, %s93
    %p107 = scmp.eq.s32.totalorder %s15, 7
    %p108 = por %p106, %p107
    %p110 = scmp.ne.s32.totalorder %s93, %s109
    %p111 = scmp.eq.s32.totalorder %s15, 0
    %p112 = por %p110, %p111
    %s113 = ssub.s32 %s16, %s35
    %s114 = ssub.s32 %s17, %s31
    %s115 = sor.u32 %s113, %s114
    %s116 = ssub.s32 %s18, %s27
    %s117 = sor.u32 %s115, %s116
    %p118 = scmp.eq.s32.totalorder %s117, 0
    %s120 = sadd.s32 %s119, 1
    %s121 = scalar_select %p118, %s119, %s120
    %p124 = pneg %p118
    %p125 = scmp.eq.s32.totalorder %s9, 7
    %p126 = por %p124, %p125
    %p127 = scmp.ne.s32.totalorder %s119, %s122
    %p128 = scmp.eq.s32.totalorder %s9, 0
    %p129 = por %p127, %p128
    %p130 = scmp.ne.s32.totalorder %s119, %s122
    %p131 = scmp.eq.s32.totalorder %s14, 7
    %p132 = por %p130, %p131
    %p133 = scmp.ne.s32.totalorder %s122, %s123
    %p134 = scmp.eq.s32.totalorder %s14, 0
    %p135 = por %p133, %p134
    %p136 = scmp.ne.s32.totalorder %s122, %s123
    %p137 = scmp.eq.s32.totalorder %s15, 7
    %p138 = por %p136, %p137
    %p140 = scmp.ne.s32.totalorder %s123, %s139
    %p141 = scmp.eq.s32.totalorder %s15, 0
    %p142 = por %p140, %p141
    %p143 = scmp.le.s32.totalorder 1, %s9
    %p144 = scmp.lt.s32.totalorder %s9, 9
    %p145 = pnand %p143, %p144
    %p146 = pneg %p145
    // Predicated region
    $region9: #{trans_conv_block.1} parent=5 // pred_check
      _
    $region10: #{trans_conv_block.1} parent=5 // pred_check_branch
      %148 = sbr.rel (%p145) target = $region12
    $region11: #{trans_conv_block.1} parent=5 // pred_region
      %s149 = ssub.s32 %s9, 1
      // Predicated region
      $region13: #{trans_conv_block.1} parent=11 // pred_check
        %p150 = pneg %p75
      $region14: #{trans_conv_block.1} parent=11 // pred_check_branch
        %152 = sbr.rel (%p150) target = $region16
      $region15: #{trans_conv_block.1} parent=11 // pred_region
        _
      $region16: #{trans_conv_block.1} parent=11 // pred_fallthru
        _
    $region12: #{trans_conv_block.1} parent=5 // pred_fallthru
      _
    %p153 = scmp.lt.s32.totalorder %s9, 8
    // Predicated region
    $region17: #{trans_conv_block.1} parent=5 // pred_check
      %p154 = pneg %p153
    $region18: #{trans_conv_block.1} parent=5 // pred_check_branch
      %156 = sbr.rel (%p154) target = $region20
    $region19: #{trans_conv_block.1} parent=5 // pred_region
      // Predicated region
      $region21: #{trans_conv_block.1} parent=19 // pred_check
        %p157 = pneg %p48
      $region22: #{trans_conv_block.1} parent=19 // pred_check_branch
        %159 = sbr.rel (%p157) target = $region24
      $region23: #{trans_conv_block.1} parent=19 // pred_region
        %p160 = scmp.lt.s32.totalorder %s17, 3
        %s161 = scalar_select %p160, %s17, 3
        %s162 = smul.addr %s161, 4
        %s163 = scalar_lea.vmem %s0, %s162
      $region24: #{trans_conv_block.1} parent=19 // pred_fallthru
        _
      // Predicated region
      $region25: #{trans_conv_block.1} parent=19 // pred_check
        %p164 = pneg %p99
      $region26: #{trans_conv_block.1} parent=19 // pred_check_branch
        %166 = sbr.rel (%p164) target = $region28
      $region27: #{trans_conv_block.1} parent=19 // pred_region
        %s167 = smul.u32 2, %s18
        %p168 = scmp.lt.s32.totalorder %s16, 1
        %s169 = scalar_select %p168, %s16, 1
        %p170 = scmp.lt.s32.totalorder %s17, 3
        %s171 = scalar_select %p170, %s17, 3
        %p172 = scmp.lt.s32.totalorder %s167, 1
        %s173 = scalar_select %p172, %s167, 1
        %s174 = smul.addr %s171, 4
        %s175 = sadd.s32 %s173, %s174
        %s176 = smul.addr %s169, 16
        %s177 = sadd.s32 %s175, %s176
        %s178 = smul.addr %s177, 4
        %s179 = scalar_lea.vmem %s2, %s178
        %s180 = smul.u32 2, %s18
      $region28: #{trans_conv_block.1} parent=19 // pred_fallthru
        _
    $region20: #{trans_conv_block.1} parent=5 // pred_fallthru
      _
    %p181 = scmp.le.s32.totalorder 1, %s9
    %p182 = scmp.lt.s32.totalorder %s9, 9
    %p183 = pnand %p181, %p182
    %p184 = pneg %p183
    // Predicated region
    $region29: #{trans_conv_block.1} parent=5 // pred_check
      _
    $region30: #{trans_conv_block.1} parent=5 // pred_check_branch
      %186 = sbr.rel (%p183) target = $region32
    $region31: #{trans_conv_block.1} parent=5 // pred_region
      %s187 = ssub.s32 %s9, 1
      %p188 = scmp.lt.s32.totalorder %s20, 3
      %s189 = scalar_select %p188, %s20, 3
      %s190 = smul.addr %s189, 4
      %s191 = scalar_lea.vmem %s0, %s190
      %p192 = pneg %p54
      %p193 = pneg %p51
      %p194 = pneg %p75
      %p195 = pneg %p72
      %s196 = smul.u32 2, %s21
      %p197 = scmp.lt.s32.totalorder %s19, 1
      %s198 = scalar_select %p197, %s19, 1
      %p199 = scmp.lt.s32.totalorder %s20, 3
      %s200 = scalar_select %p199, %s20, 3
      %p201 = scmp.lt.s32.totalorder %s196, 1
      %s202 = scalar_select %p201, %s196, 1
      %s203 = smul.addr %s200, 4
      %s204 = sadd.s32 %s202, %s203
      %s205 = smul.addr %s198, 16
      %s206 = sadd.s32 %s204, %s205
      %s207 = smul.addr %s206, 4
      %s208 = scalar_lea.vmem %s2, %s207
      %p209 = pneg %p105
      %p210 = pneg %p102
      %p211 = pneg %p135
      %p212 = pneg %p132
      %s213 = smul.u32 2, %s21
      %p214 = scmp.lt.s32.totalorder %s19, 1
      %s215 = scalar_select %p214, %s19, 1
      %p216 = scmp.lt.s32.totalorder %s20, 3
      %s217 = scalar_select %p216, %s20, 3
      %p218 = scmp.lt.s32.totalorder %s213, 1
      %s219 = scalar_select %p218, %s213, 1
      %s220 = smul.addr %s217, 2
      %s221 = sadd.s32 %s219, %s220
      %s222 = smul.addr %s215, 8
      %s223 = sadd.s32 %s221, %s222
      %s224 = smul.addr %s223, 8
      %s225 = scalar_lea.vmem %s3, %s224
      %p226 = scmp.lt.s32.totalorder %s20, 3
      %s227 = scalar_select %p226, %s20, 3
      %s228 = smul.addr %s227, 4
      %s229 = scalar_lea.vmem %s0, %s228
      %s230 = smul.u32 2, %s21
      %p231 = scmp.lt.s32.totalorder %s19, 1
      %s232 = scalar_select %p231, %s19, 1
      %p233 = scmp.lt.s32.totalorder %s20, 3
      %s234 = scalar_select %p233, %s20, 3
      %p235 = scmp.lt.s32.totalorder %s230, 1
      %s236 = scalar_select %p235, %s230, 1
      %s237 = smul.addr %s234, 4
      %s238 = sadd.s32 %s236, %s237
      %s239 = smul.addr %s232, 16
      %s240 = sadd.s32 %s238, %s239
      %s241 = smul.addr %s240, 4
      %s242 = scalar_lea.vmem %s2, %s241
      %s243 = smul.u32 2, %s21
      %s244 = smul.u32 2, %s21
      %p245 = scmp.lt.s32.totalorder %s19, 1
      %s246 = scalar_select %p245, %s19, 1
      %p247 = scmp.lt.s32.totalorder %s20, 3
      %s248 = scalar_select %p247, %s20, 3
      %p249 = scmp.lt.s32.totalorder %s244, 1
      %s250 = scalar_select %p249, %s244, 1
      %s251 = smul.addr %s248, 2
      %s252 = sadd.s32 %s250, %s251
      %s253 = smul.addr %s246, 8
      %s254 = sadd.s32 %s252, %s253
      %s255 = smul.addr %s254, 8
      %s256 = scalar_lea.vmem %s3, %s255
      %s257 = smul.u32 2, %s21
      %v259 = vld [vmem:[%s229] sm:$0xf]
      %v260 = vld [vmem:[%s242] sm:$0xff]
      %v261 = vld [vmem:[%s242 + $0x8] sm:$0xff]
      %v262 = vld [vmem:[%s1] sm:$0xff]
      %264 = vset.pattern.permute.xlu0 0
      %265 = vperm.xlu0 %264, %v262
      %v266 = vpop.permute.xlu0 %265
      %v270 = vunpack.c.l.b16 %v260
      %v271 = vunpack.c.h.b16 %v260
      %v272 = vunpack.c.l.b16 %v261
      %v273 = vunpack.c.h.b16 %v261
      %v274 = vpack.c.b16 %v272, %v270
      %v275 = vpack.c.b16 %v273, %v271
      %vm278 = vcmask 130048
      %v280 = vsel %vm278, %v259, 0
      %282 = vmatpush.bf16.msra.mxu0 0
      %283 = vmatpush.bf16.msra.mxu0 0
      %284 = vmatpush.bf16.msra.mxu0 0
      %285 = vmatpush.bf16.msra.mxu0 0
      %286 = vmatpush.bf16.msra.mxu0 0
      %287 = vmatpush.bf16.msra.mxu0 0
      %288 = vmatpush.bf16.msra.mxu0 0
      %289 = vmatpush.bf16.msra.mxu0 %v274
      %290 = vmatmul.bf16.gmra.mxu0 %v280
      %v291 = vpop.f32.mrf.mxu0
      %v292 = vadd.f32 %v266, %v291
      %v293 = vpop.f32.mrf.mxu0
      %294 = vdwg.mxu0
      %295 = vmatpush.bf16.msra.mxu0 0
      %296 = vmatpush.bf16.msra.mxu0 0
      %297 = vmatpush.bf16.msra.mxu0 0
      %298 = vmatpush.bf16.msra.mxu0 0
      %299 = vmatpush.bf16.msra.mxu0 0
      %300 = vmatpush.bf16.msra.mxu0 0
      %301 = vmatpush.bf16.msra.mxu0 0
      %302 = vmatpush.bf16.msra.mxu0 %v275
      %303 = vmatmul.bf16.gmra.mxu0 %v280
      %v304 = vpop.f32.mrf.mxu0
      %v305 = vadd.f32 %v266, %v304
      %v306 = vpop.f32.mrf.mxu0
      %307 = vdwg.mxu0
      %308 = vst [vmem:[%s256] sm:$0xff] %v292
      %309 = vst [vmem:[%s256 + $0x8] sm:$0xff] %v305
      %s310 = smul.u32 2, %s21
      %p311 = scmp.lt.s32.totalorder %s19, 1
      %s312 = scalar_select %p311, %s19, 1
      %p313 = scmp.lt.s32.totalorder %s20, 3
      %s314 = scalar_select %p313, %s20, 3
      %p315 = scmp.lt.s32.totalorder %s310, 1
      %s316 = scalar_select %p315, %s310, 1
      %s317 = smul.addr %s314, 2
      %s318 = sadd.s32 %s316, %s317
      %s319 = smul.addr %s312, 8
      %s320 = sadd.s32 %s318, %s319
      %s321 = smul.addr %s320, 8
      %s322 = scalar_lea.vmem %s3, %s321
      // Predicated region
      $region33: #{trans_conv_block.1} parent=31 // pred_check
        %p323 = pneg %p132
      $region34: #{trans_conv_block.1} parent=31 // pred_check_branch
        %325 = sbr.rel (%p323) target = $region36
      $region35: #{trans_conv_block.1} parent=31 // pred_region
        %s326 = smul.u32 2, %s21
      $region36: #{trans_conv_block.1} parent=31 // pred_fallthru
        _
    $region32: #{trans_conv_block.1} parent=5 // pred_fallthru
      _
    %p327 = scmp.le.s32.totalorder 2, %s9
    // Predicated region
    $region37: #{trans_conv_block.1} parent=5 // pred_check
      %p328 = pneg %p327
    $region38: #{trans_conv_block.1} parent=5 // pred_check_branch
      %330 = sbr.rel (%p328) target = $region40
    $region39: #{trans_conv_block.1} parent=5 // pred_region
      %s331 = ssub.s32 %s9, 2
      // Predicated region
      $region41: #{trans_conv_block.1} parent=39 // pred_check
        %p332 = pneg %p138
      $region42: #{trans_conv_block.1} parent=39 // pred_check_branch
        %334 = sbr.rel (%p332) target = $region44
      $region43: #{trans_conv_block.1} parent=39 // pred_region
        %s335 = smul.u32 2, %s24
        %p336 = scmp.lt.s32.totalorder %s22, 1
        %s337 = scalar_select %p336, %s22, 1
        %p338 = scmp.lt.s32.totalorder %s23, 3
        %s339 = scalar_select %p338, %s23, 3
        %p340 = scmp.lt.s32.totalorder %s335, 1
        %s341 = scalar_select %p340, %s335, 1
        %s342 = smul.addr %s339, 2
        %s343 = sadd.s32 %s341, %s342
        %s344 = smul.addr %s337, 8
        %s345 = sadd.s32 %s343, %s344
        %s346 = smul.addr %s345, 8
        %s347 = scalar_lea.vmem %s3, %s346
      $region44: #{trans_conv_block.1} parent=39 // pred_fallthru
        _
    $region40: #{trans_conv_block.1} parent=5 // pred_fallthru
      _
  $region6: #{trans_conv_block.1} parent=0 // loop_footer
    %s13 = sadd.s32 1, %s9
  $region7: #{trans_conv_block.1} parent=0 // loop_footer_branch
    %8 = sbr.rel target = $region3
  $region8: #{trans_conv_block.1} parent=0 // loop_exit
    _

</llo_original>
